<compile_context>
chip_gen: v5e
topology: v5e:2x2
jax: 0.10.0
libtpu: 0.0.40
codegen_flags: <defaults>
</compile_context>

<pallas_src>
import jax
import jax.numpy as jnp
from jax.experimental import pallas as pl
from jax.experimental.pallas import tpu as pltpu


def _round_up(x, m):
    return ((x + m - 1) // m) * m


def linear_kernel(x_ref, w_ref, b_ref, o_ref):
    # x: (tb, K) VMEM, w: (1, K) VMEM, b: (1, 1) SMEM  ->  o: (1, tb) lane-dense
    x = x_ref[...].astype(jnp.float32)
    w = w_ref[...].astype(jnp.float32)               # (1, K) broadcasts over rows
    y = jnp.sum(x * w, axis=-1, keepdims=True)        # (tb, 1): VPU mul + XLU lane reduce
    # Lane-dense store: (tb, 1) column -> (1, tb) row via XLU (free slot), then
    # one wide unmasked vst per vreg instead of a masked 1-lane store per 8 rows.
    o_ref[...] = (y.T + b_ref[0, 0]).astype(o_ref.dtype)


def _choose_row_tile(B):
    """Row tile: multiple of 128 (lane-dense out block) and >=2 grid steps when
    the batch is big enough, so v7x megacore can split the 'parallel' axis."""
    cap = 8192
    if B < 256:
        return B                       # single full-array block (tiny regime)
    return min(cap, _round_up(pl.cdiv(B, 2), 128))


def _linear_pallas(x, w, b):
    B, K = x.shape
    N = w.shape[0]                     # == 1
    assert N == 1 and w.shape[1] == K

    tb = _choose_row_tile(B)
    grid = (pl.cdiv(B, tb),)
    b_smem = b.reshape(1, 1).astype(jnp.float32)

    out_row = pl.pallas_call(
        linear_kernel,
        out_shape=jax.ShapeDtypeStruct((1, B), x.dtype),
        grid=grid,
        in_specs=[
            # Activations: one row-tile per grid step.
            pl.BlockSpec((tb, K), lambda i: (i, 0)),
            # Weight row: full array, replicated across grid steps.
            pl.BlockSpec((N, K), lambda i: (0, 0)),
            # Bias: scalar block in SMEM (no VMEM DMA / vreg for one float).
            pl.BlockSpec((1, 1), lambda i: (0, 0),
                         memory_space=pltpu.MemorySpace.SMEM),
        ],
        # Lane-dense output blocks along the last (lane) axis.
        out_specs=pl.BlockSpec((1, tb), lambda i: (0, i)),
        compiler_params=pltpu.CompilerParams(
            dimension_semantics=("parallel",),
        ),
    )(x, w, b_smem)

    # (1, B) row -> (B, 1) column; pure metadata reshape outside the kernel.
    return out_row.reshape(B, 1)


def simple_model_forward(inputs, params, *, force_pallas=False, min_pallas_batch=1024):
    """JAX equivalent of SimpleModel.forward: {'output': linear(inputs['data'])}."""
    x = inputs["data"]                 # (B, 10)
    w = params["weight"]               # (1, 10) torch layout (out, in)
    b = params["bias"]                 # (1,)

    B = x.shape[0]
    if not force_pallas and B < min_pallas_batch:
        # Tiny-batch regime: a fused XLA matvec beats any custom-kernel launch.
        return {"output": x @ w.T + b}
    return {"output": _linear_pallas(x, w, b)}


def init_params(key):
    """Deterministic init matching torch.nn.Linear(10, 1) parameter shapes."""
    kw, kb = jax.random.split(key)
    bound = 1.0 / jnp.sqrt(10.0)  # torch default: U(-1/sqrt(fan_in), 1/sqrt(fan_in))
    weight = jax.random.uniform(kw, (1, 10), jnp.float32, -bound, bound)
    bias = jax.random.uniform(kb, (1,), jnp.float32, -bound, bound)
    return {"weight": weight, "bias": bias}


if __name__ == "__main__":
    key = jax.random.PRNGKey(0)
    k_param, k_data, k_small = jax.random.split(key, 3)
    params = init_params(k_param)

    # Exercise the Pallas path at small shapes:
    #  - B=8:   single full-array block (demo size)
    #  - B=384: two grid steps, partial last tile, lane-dense partial store
    for B in (8, 384):
        x = jax.random.normal(jax.random.fold_in(k_data, B), (B, 10), jnp.float32)
        out = simple_model_forward({"data": x}, params, force_pallas=True)["output"]
        out = jax.block_until_ready(out)
        ref = x @ params["weight"].T + params["bias"]
        assert out.shape == (B, 1)
        assert jnp.allclose(out, ref, atol=1e-5, rtol=1e-5)

    # Small-batch dispatch (plain fused XLA path) sanity check.
    xs = jax.random.normal(k_small, (8, 10), jnp.float32)
    out_small = jax.block_until_ready(
        simple_model_forward({"data": xs}, params)["output"])
    ref_small = xs @ params["weight"].T + params["bias"]
    assert jnp.allclose(out_small, ref_small, atol=1e-5, rtol=1e-5)

    print("KERNEL_OK")
</pallas_src>

<mosaic_0001>
module attributes {stable_mosaic.version = 11 : i64} {
  func.func @linear_kernel(%arg0: i32, %arg1: memref<8x10xf32, #tpu.memory_space<vmem>>, %arg2: memref<1x10xf32, #tpu.memory_space<vmem>>, %arg3: memref<1x1xf32, #tpu.memory_space<smem>>, %arg4: memref<1x8xf32, #tpu.memory_space<vmem>>) attributes {dimension_semantics = [#tpu.dimension_semantics<parallel>], iteration_bounds = array<i64: 1>, scalar_prefetch = 0 : i64, scratch_operands = 0 : i64, tpu.core_type = #tpu.core_type<tc>, window_params = [{transform_indices = @transform_0, window_bounds = array<i64: 8, 10>}, {pipeline_mode = #tpu.pipeline_mode<synchronous>, transform_indices = @transform_1, window_bounds = array<i64: 1, 10>}, {transform_indices = @transform_2, window_bounds = array<i64: 1, 1>}, {transform_indices = @transform_3, window_bounds = array<i64: 1, 8>}]} {
    %c0 = arith.constant 0 : index
    %c0_0 = arith.constant 0 : index
    %0 = vector.load %arg1[%c0, %c0_0] : memref<8x10xf32, #tpu.memory_space<vmem>>, vector<8x10xf32>
    %c0_1 = arith.constant 0 : index
    %c0_2 = arith.constant 0 : index
    %1 = vector.load %arg2[%c0_1, %c0_2] : memref<1x10xf32, #tpu.memory_space<vmem>>, vector<1x10xf32>
    %2 = vector.broadcast %1 : vector<1x10xf32> to vector<8x10xf32>
    %3 = arith.mulf %0, %2 : vector<8x10xf32>
    %cst = arith.constant dense<0.000000e+00> : vector<8xf32>
    %4 = vector.multi_reduction <add>, %3, %cst [1] : vector<8x10xf32> to vector<8xf32>
    %5 = vector.shape_cast %4 : vector<8xf32> to vector<8x1xf32>
    %6 = tpu.transpose %5, [1, 0] : vector<8x1xf32> -> vector<1x8xf32>
    %c0_3 = arith.constant 0 : index
    %c0_4 = arith.constant 0 : index
    %7 = memref.load %arg3[%c0_3, %c0_4] : memref<1x1xf32, #tpu.memory_space<smem>>
    %8 = vector.broadcast %7 : f32 to vector<1x8xf32>
    %9 = arith.addf %6, %8 : vector<1x8xf32>
    %c0_5 = arith.constant 0 : index
    %c0_6 = arith.constant 0 : index
    %10 = vector.load %arg4[%c0_5, %c0_6] : memref<1x8xf32, #tpu.memory_space<vmem>>, vector<1x8xf32>
    tpu.vector_store %arg4[%c0_5, %c0_6], %9 {strides = array<i32>} : memref<1x8xf32, #tpu.memory_space<vmem>>, vector<1x8xf32>,
    return
  }
  func.func @transform_0(%arg0: i32) -> (i32, i32) {
    %c0_i32 = arith.constant 0 : i32
    %c0_i32_0 = arith.constant 0 : i32
    return %arg0, %c0_i32 : i32, i32
  }
  func.func @transform_1(%arg0: i32) -> (i32, i32) {
    %c0_i32 = arith.constant 0 : i32
    %c0_i32_0 = arith.constant 0 : i32
    %c0_i32_1 = arith.constant 0 : i32
    return %c0_i32, %c0_i32_0 : i32, i32
  }
  func.func @transform_2(%arg0: i32) -> (i32, i32) {
    %c0_i32 = arith.constant 0 : i32
    %c0_i32_0 = arith.constant 0 : i32
    %c0_i32_1 = arith.constant 0 : i32
    return %c0_i32, %c0_i32_0 : i32, i32
  }
  func.func @transform_3(%arg0: i32) -> (i32, i32) {
    %c0_i32 = arith.constant 0 : i32
    %c0_i32_0 = arith.constant 0 : i32
    return %c0_i32, %arg0 : i32, i32
  }
}

</mosaic_0001>

<llo_original>
// kernel: tpu_custom_call.1
$region0: #{tpu_custom_call.1}
  #allocation0 [shape = 'u32[]', space=smem, size = 0x4, offset = 0x4, fixed_abs, tag = 'smem constant byte address 0x4 - core index']
  #allocation1 [shape = 'u32[72,128]{1,0:T(1,128)}', space=vmem, size = 0x9000, scoped, tag = 'internal scratch']
  #allocation2 [shape = 'f32[1,1]{1,0:T(1,128)S(6)}', space=smem, size = 0x200, scoped, tag = 'scoped memory for tpu_custom_call.1']
  %s0 = inlined_call_operand.hbm [shape: f32[8,10], index: 0, kind: input, shape index: {}]
  %s1 = inlined_call_operand.vmem [shape: f32[1,10], index: 1, kind: input, shape index: {}]
  %s2 = inlined_call_operand.<no memory space> [shape: f32[1,1], index: 2, kind: input, shape index: {}]
  %s3 = inlined_call_operand.hbm [shape: f32[1,8], index: 3, kind: output, shape index: {}]
  %s4 = sld [smem:[#allocation0]]
  $region26: #{tpu_custom_call.1} parent=0
    _
  %s6 = ssub.s32 1, %s4
  %s7 = scalar_select 0, %s6, %s4
  %8 = sst [smem:[#allocation2]] %s2
  $region1: #{tpu_custom_call.1} parent=0
    #allocation3 [shape = 'u8[4096]{0}', space=vmem, size = 0x1000, scoped, tag = 'input window, operand 0, single buffered']
    #allocation4 [shape = 's32[1]{0}', space=sflag, size = 0x4, scoped, tag = 'scoped memory for tpu_custom_call.1']
    #allocation5 [shape = 's32[1]{0}', space=sflag, size = 0x4, scoped, tag = 'scoped memory for tpu_custom_call.1']
    #allocation6 [shape = 'u8[512]{0}', space=vmem, size = 0x400, scoped, tag = 'output window, operand 0, single buffered']
    %9 = vsyncpa [#allocation4], 0
    %10 = vsyncpa [#allocation5], 0
    // Predicated region
    $region2: #{tpu_custom_call.1} parent=1 // pred_check
      _
    $region3: #{tpu_custom_call.1} parent=1 // pred_check_branch
      %12 = sbr.rel (0) target = $region5
    $region4: #{tpu_custom_call.1} parent=1 // pred_region
      %14 = vsyncadd [#allocation4], 0
      %s16 = sshll.u32 %s0, 4
      %s17 = int_to_ptr.hbm [resolvable:$true] %s16
      %s18 = sshll.u32 [#allocation3], 4
      %s19 = int_to_ptr.vmem [resolvable:$true] %s18
      %21 = dma.hbm_to_vmem [thread:$0]  %s17, 128, %s19, [#allocation4]
    $region5: #{tpu_custom_call.1} parent=1 // pred_fallthru
      _
    // Predicated region
    $region6: #{tpu_custom_call.1} parent=1 // pred_check
      _
    $region7: #{tpu_custom_call.1} parent=1 // pred_check_branch
      %23 = sbr.rel (0) target = $region9
    $region8: #{tpu_custom_call.1} parent=1 // pred_region
      _
    $region9: #{tpu_custom_call.1} parent=1 // pred_fallthru
      _
    // Predicated region
    $region10: #{tpu_custom_call.1} parent=1 // pred_check
      _
    $region11: #{tpu_custom_call.1} parent=1 // pred_check_branch
      %25 = sbr.rel (0) target = $region13
    $region12: #{tpu_custom_call.1} parent=1 // pred_region
      _
    $region13: #{tpu_custom_call.1} parent=1 // pred_fallthru
      _
    // Predicated region
    $region14: #{tpu_custom_call.1} parent=1 // pred_check
      _
    $region15: #{tpu_custom_call.1} parent=1 // pred_check_branch
      %27 = sbr.rel (0) target = $region17
    $region16: #{tpu_custom_call.1} parent=1 // pred_region
      %29 = dma.done [#allocation4], 128
    $region17: #{tpu_custom_call.1} parent=1 // pred_fallthru
      _
    %v30 = vld [vmem:[#allocation3] sm:$0xff]
    %v31 = vld [vmem:[%s1] sm:$0x1]
    %v33 = vperm.slane %v31, 0
    %v35 = vmul.f32 %v30, %v33
    %vm36 = vcmask 80896
    %v37 = vsel %vm36, %v35, 0.0
    %38 = vadd.xlane.f32.xlu0 %v37
    %v39 = vpop.xlane.xlu0 %38
    %40 = vxpose.xlu0.b32.start [1/16] %v39, 128
    %41 = vxpose.xlu0.b32.cont [2/16] 0.0, 128
    %42 = vxpose.xlu0.b32.cont [3/16] 0.0, 128
    %43 = vxpose.xlu0.b32.cont [4/16] 0.0, 128
    %44 = vxpose.xlu0.b32.cont [5/16] 0.0, 128
    %45 = vxpose.xlu0.b32.cont [6/16] 0.0, 128
    %46 = vxpose.xlu0.b32.cont [7/16] 0.0, 128
    %47 = vxpose.xlu0.b32.cont [8/16] 0.0, 128
    %48 = vxpose.xlu0.b32.cont [9/16] 0.0, 128
    %49 = vxpose.xlu0.b32.cont [10/16] 0.0, 128
    %50 = vxpose.xlu0.b32.cont [11/16] 0.0, 128
    %51 = vxpose.xlu0.b32.cont [12/16] 0.0, 128
    %52 = vxpose.xlu0.b32.cont [13/16] 0.0, 128
    %53 = vxpose.xlu0.b32.cont [14/16] 0.0, 128
    %54 = vxpose.xlu0.b32.cont [15/16] 0.0, 128
    %55 = vxpose.xlu0.b32.end [16/16] 0.0, 128
    %v56 = vpop.trf.xlu0
    %v57 = vpop.trf.xlu0
    %v58 = vpop.trf.xlu0
    %v59 = vpop.trf.xlu0
    %v60 = vpop.trf.xlu0
    %v61 = vpop.trf.xlu0
    %v62 = vpop.trf.xlu0
    %v63 = vpop.trf.xlu0
    %v64 = vpop.trf.xlu0
    %v65 = vpop.trf.xlu0
    %v66 = vpop.trf.xlu0
    %v67 = vpop.trf.xlu0
    %v68 = vpop.trf.xlu0
    %v69 = vpop.trf.xlu0
    %v70 = vpop.trf.xlu0
    %v71 = vpop.trf.xlu0
    %s72 = sld [smem:[#allocation2]]
    %v73 = vstv %s72
    %v74 = vadd.f32 %v56, %v73
    %vm75 = vcmask 57344
    %76 = vst.msk [vmem:[#allocation6] sm:$0x1] %vm75, %v74
    // Predicated region
    $region18: #{tpu_custom_call.1} parent=1 // pred_check
      _
    $region19: #{tpu_custom_call.1} parent=1 // pred_check_branch
      %78 = sbr.rel (0) target = $region21
    $region20: #{tpu_custom_call.1} parent=1 // pred_region
      %80 = vsyncadd [#allocation5], 0
      %s82 = sshll.u32 [#allocation6], 4
      %s83 = int_to_ptr.vmem [resolvable:$true] %s82
      %s84 = sshll.u32 %s3, 4
      %s85 = int_to_ptr.hbm [resolvable:$true] %s84
      %87 = dma.vmem_to_hbm [thread:$0]  %s83, 16, %s85, [#allocation5]
    $region21: #{tpu_custom_call.1} parent=1 // pred_fallthru
      _
    // Predicated region
    $region22: #{tpu_custom_call.1} parent=1 // pred_check
      _
    $region23: #{tpu_custom_call.1} parent=1 // pred_check_branch
      %89 = sbr.rel (0) target = $region25
    $region24: #{tpu_custom_call.1} parent=1 // pred_region
      %91 = dma.done [#allocation5], 16
    $region25: #{tpu_custom_call.1} parent=1 // pred_fallthru
      _
    %92 = vsyncpa [#allocation4], 1
    %93 = vsyncpa [#allocation5], 1

</llo_original>
